<compile_context>
chip_gen: v5e
topology: v5e:2x2
jax: 0.10.0
libtpu: 0.0.40
codegen_flags: <defaults>
</compile_context>

<pallas_src>
import functools
import numpy as np
import jax
import jax.numpy as jnp
from jax import lax
from jax.experimental import pallas as pl
from jax.experimental.pallas import tpu as pltpu

# Safe on every TPU generation (default is 16 MiB on v5e / 32 MiB on v6e,v7x).
# For production-size shapes raise per generation (~64-80 MiB v5e/v6e, ~40 MiB v7x).
_VMEM_LIMIT = 32 * 1024 * 1024


# ------------------------------ tiling helpers -------------------------------

def _pick_tile_m(n, cap):
    """Largest divisor of n that is <= cap and a multiple of 8 (else full n)."""
    best = n
    for d in range(min(n, cap), 0, -1):
        if n % d == 0 and (d % 8 == 0 or d == n):
            best = d
            break
    return best


def _pick_tile_h(ho, wo, cap_positions):
    """Largest divisor of Ho whose tile (tile_h * Wo positions) fits the cap."""
    cap = max(1, cap_positions // max(wo, 1))
    best = 1
    for d in range(1, ho + 1):
        if ho % d == 0 and d <= cap:
            best = d
    return best


# ----------------------------- Pallas kernels --------------------------------

def _matmul_shift_relu_kernel(a_ref, w_ref, shift_ref, o_ref):
    # out = relu(A @ W' + shift)   (BN scale already folded into W')
    acc = jnp.dot(a_ref[...], w_ref[...], preferred_element_type=jnp.float32)
    o_ref[...] = jnp.maximum(acc + shift_ref[...], 0.0).astype(o_ref.dtype)


def matmul_shift_relu(a, w, shift, out_dtype, tile_m):
    M, K = a.shape
    C = w.shape[1]
    return pl.pallas_call(
        _matmul_shift_relu_kernel,
        out_shape=jax.ShapeDtypeStruct((M, C), out_dtype),
        grid_spec=pltpu.PrefetchScalarGridSpec(
            num_scalar_prefetch=0,
            grid=(M // tile_m,),
            in_specs=[
                pl.BlockSpec((tile_m, K), lambda i: (i, 0)),
                pl.BlockSpec((K, C), lambda i: (0, 0)),     # resident weight
                pl.BlockSpec((1, C), lambda i: (0, 0)),     # resident shift
            ],
            out_specs=pl.BlockSpec((tile_m, C), lambda i: (i, 0)),
        ),
        compiler_params=pltpu.CompilerParams(
            dimension_semantics=("parallel",),
            vmem_limit_bytes=_VMEM_LIMIT),
    )(a, w, shift)


def _grouped_conv3x3_shift_relu_kernel(x_ref, w_ref, shift_ref, o_ref, *, th, wo):
    # x_ref:  (1, Hp, Wp, C) zero-padded bf16 sample (resident across the h-tile axis).
    # w_ref:  (9*C, C) dense block-diagonal taps (tap-major, cin within), BN scale folded.
    # o_ref:  (1, th*wo, C) output tile.
    c = x_ref.shape[-1]
    h0 = pl.program_id(1) * th
    xwin = x_ref[0, pl.ds(h0, th + 2)]                      # (th+2, Wp, C)
    # Build the (th*wo, 9*C) patch slab and do a single K=9C matmul (one MXU pass).
    taps = [xwin[ky:ky + th, kx:kx + wo, :].reshape(th * wo, c)
            for ky in range(3) for kx in range(3)]
    patches = jnp.concatenate(taps, axis=-1)                # (th*wo, 9*C) bf16
    y = jnp.dot(patches, w_ref[...], preferred_element_type=jnp.float32)
    o_ref[0] = jnp.maximum(y + shift_ref[...], 0.0).astype(o_ref.dtype)


def grouped_conv3x3_shift_relu(x_pad, w_fused, shift, Ho, Wo, tile_h):
    N, Hp, Wp, C = x_pad.shape
    P = Ho * Wo
    tp = tile_h * Wo
    kern = functools.partial(_grouped_conv3x3_shift_relu_kernel, th=tile_h, wo=Wo)
    return pl.pallas_call(
        kern,
        out_shape=jax.ShapeDtypeStruct((N, P, C), jnp.bfloat16),
        grid_spec=pltpu.PrefetchScalarGridSpec(
            num_scalar_prefetch=0,
            grid=(N, Ho // tile_h),
            in_specs=[
                # Whole padded sample; constant block index along the h axis => DMA'd
                # once per sample and kept resident while the h-tiles stream out.
                pl.BlockSpec((1, Hp, Wp, C), lambda n, h: (n, 0, 0, 0)),
                pl.BlockSpec((9 * C, C), lambda n, h: (0, 0)),   # resident weight
                pl.BlockSpec((1, C), lambda n, h: (0, 0)),       # resident shift
            ],
            out_specs=pl.BlockSpec((1, tp, C), lambda n, h: (n, h, 0)),
        ),
        compiler_params=pltpu.CompilerParams(
            dimension_semantics=("parallel", "arbitrary"),
            vmem_limit_bytes=_VMEM_LIMIT),
    )(x_pad, w_fused, shift)


def _conv1x1_down_residual_relu_kernel(h_ref, w3_ref, r_ref, wd_ref, bd_ref, o_ref):
    # out = relu(H @ W3 + R @ Wd' + bd)   (downsample BN scale folded into Wd')
    main = jnp.dot(h_ref[...], w3_ref[...], preferred_element_type=jnp.float32)
    res = jnp.dot(r_ref[...], wd_ref[...], preferred_element_type=jnp.float32)
    o_ref[...] = jnp.maximum(main + res + bd_ref[...], 0.0).astype(o_ref.dtype)


def conv1x1_down_residual_relu(h, w3, r, wd, bd, tile_m):
    M, C = h.shape
    Kr = r.shape[1]
    return pl.pallas_call(
        _conv1x1_down_residual_relu_kernel,
        out_shape=jax.ShapeDtypeStruct((M, C), jnp.float32),
        grid_spec=pltpu.PrefetchScalarGridSpec(
            num_scalar_prefetch=0,
            grid=(M // tile_m,),
            in_specs=[
                pl.BlockSpec((tile_m, C), lambda i: (i, 0)),
                pl.BlockSpec((C, C), lambda i: (0, 0)),
                pl.BlockSpec((tile_m, Kr), lambda i: (i, 0)),
                pl.BlockSpec((Kr, C), lambda i: (0, 0)),
                pl.BlockSpec((1, C), lambda i: (0, 0)),
            ],
            out_specs=pl.BlockSpec((tile_m, C), lambda i: (i, 0)),
        ),
        compiler_params=pltpu.CompilerParams(
            dimension_semantics=("parallel",),
            vmem_limit_bytes=_VMEM_LIMIT),
    )(h, w3, r, wd, bd)


def _conv1x1_identity_residual_relu_kernel(h_ref, w3_ref, r_ref, o_ref):
    # Fast path: out = relu(H @ W3 + R)   (no downsample branch, residual in f32)
    main = jnp.dot(h_ref[...], w3_ref[...], preferred_element_type=jnp.float32)
    o_ref[...] = jnp.maximum(main + r_ref[...], 0.0).astype(o_ref.dtype)


def conv1x1_identity_residual_relu(h, w3, r, tile_m):
    M, C = h.shape
    return pl.pallas_call(
        _conv1x1_identity_residual_relu_kernel,
        out_shape=jax.ShapeDtypeStruct((M, C), jnp.float32),
        grid_spec=pltpu.PrefetchScalarGridSpec(
            num_scalar_prefetch=0,
            grid=(M // tile_m,),
            in_specs=[
                pl.BlockSpec((tile_m, C), lambda i: (i, 0)),
                pl.BlockSpec((C, C), lambda i: (0, 0)),
                pl.BlockSpec((tile_m, C), lambda i: (i, 0)),
            ],
            out_specs=pl.BlockSpec((tile_m, C), lambda i: (i, 0)),
        ),
        compiler_params=pltpu.CompilerParams(
            dimension_semantics=("parallel",),
            vmem_limit_bytes=_VMEM_LIMIT),
    )(h, w3, r)


# ----------------------------- parameter setup -------------------------------

def bn_affine(gamma, beta, mean, var, eps=1e-5):
    scale = gamma / jnp.sqrt(var + eps)
    shift = beta - mean * scale
    return scale.reshape(1, -1), shift.reshape(1, -1)


def init_params(key, in_channels, out_channels, stride, cardinality):
    C = out_channels
    cg = C // cardinality
    ks = jax.random.split(key, 16)
    p = {}
    p["w1"] = 0.1 * jax.random.normal(ks[0], (C, in_channels, 1, 1), jnp.float32)
    p["bn1_gamma"] = jax.random.uniform(ks[1], (C,), jnp.float32, 0.5, 1.5)
    p["bn1_beta"] = 0.1 * jax.random.normal(ks[2], (C,), jnp.float32)
    p["bn1_mean"] = 0.1 * jax.random.normal(ks[3], (C,), jnp.float32)
    p["bn1_var"] = jax.random.uniform(ks[4], (C,), jnp.float32, 0.5, 1.5)
    p["w2"] = 0.1 * jax.random.normal(ks[5], (C, cg, 3, 3), jnp.float32)
    p["bn2_gamma"] = jax.random.uniform(ks[6], (C,), jnp.float32, 0.5, 1.5)
    p["bn2_beta"] = 0.1 * jax.random.normal(ks[7], (C,), jnp.float32)
    p["bn2_mean"] = 0.1 * jax.random.normal(ks[8], (C,), jnp.float32)
    p["bn2_var"] = jax.random.uniform(ks[9], (C,), jnp.float32, 0.5, 1.5)
    p["w3"] = 0.1 * jax.random.normal(ks[10], (C, C, 1, 1), jnp.float32)
    if stride != 1 or in_channels != out_channels:
        p["wd"] = 0.1 * jax.random.normal(ks[11], (C, in_channels, 1, 1), jnp.float32)
        p["bnd_gamma"] = jax.random.uniform(ks[12], (C,), jnp.float32, 0.5, 1.5)
        p["bnd_beta"] = 0.1 * jax.random.normal(ks[13], (C,), jnp.float32)
        p["bnd_mean"] = 0.1 * jax.random.normal(ks[14], (C,), jnp.float32)
        p["bnd_var"] = jax.random.uniform(ks[15], (C,), jnp.float32, 0.5, 1.5)
    return p


# ----------------------------- forward wrapper --------------------------------

def grouped_residual_block_pallas(x_nchw, p, stride, cardinality):
    N, Cin, H, W = x_nchw.shape
    C = p["w1"].shape[0]
    G = cardinality
    cg = C // G
    # Lane density: sub-128 output channels would lower to masked partial stores.
    assert C % 128 == 0, "out_channels must be a multiple of 128 for lane-dense TPU tiles"

    # Layout glue: NCHW -> NHWC; stride of the 1x1 convs == spatial subsample.
    x_nhwc = jnp.transpose(x_nchw, (0, 2, 3, 1))
    xs = x_nhwc[:, ::stride, ::stride, :]                   # (N, Ho, Wo, Cin)
    Ho, Wo = xs.shape[1], xs.shape[2]
    P = Ho * Wo
    M = N * P
    xs2d_f32 = xs.reshape(M, Cin)
    xs2d_bf16 = xs2d_f32.astype(jnp.bfloat16)

    tile_m = _pick_tile_m(M, 256)          # rows per 1x1-kernel grid step
    tile_h = _pick_tile_h(Ho, Wo, 128)     # image rows per grouped-conv grid step

    # --- conv1 + bn1 + relu (BN scale folded into the weight columns) ---
    s1, b1 = bn_affine(p["bn1_gamma"], p["bn1_beta"], p["bn1_mean"], p["bn1_var"])
    w1 = (jnp.transpose(p["w1"][:, :, 0, 0]) * s1).astype(jnp.bfloat16)   # (Cin, C)
    h1 = matmul_shift_relu(xs2d_bf16, w1, b1, jnp.bfloat16, tile_m)       # (M, C) bf16

    # --- grouped 3x3 conv + bn2 + relu ---
    # Dense block-diagonal weight per tap via one einsum (no per-group scatter loop),
    # BN scale folded into cout, reshaped to the fused (9*C, C) tap-major layout.
    w2g = p["w2"].reshape(G, cg, cg, 3, 3)                  # (g, o, i, ky, kx)
    t = jnp.transpose(w2g, (3, 4, 0, 2, 1))                 # (ky, kx, g, i, o)
    eye_g = jnp.eye(G, dtype=t.dtype)
    dense = jnp.einsum("klgio,gh->klgiho", t, eye_g).reshape(3, 3, C, C)
    s2, b2 = bn_affine(p["bn2_gamma"], p["bn2_beta"], p["bn2_mean"], p["bn2_var"])
    w2f = (dense * s2.reshape(1, 1, 1, C)).reshape(9 * C, C).astype(jnp.bfloat16)
    h1_pad = jnp.pad(h1.reshape(N, Ho, Wo, C), ((0, 0), (1, 1), (1, 1), (0, 0)))
    h2 = grouped_conv3x3_shift_relu(h1_pad, w2f, b2, Ho, Wo, tile_h)      # (N, P, C) bf16

    # --- conv3 + residual (downsample or identity fast path) + relu ---
    w3 = jnp.transpose(p["w3"][:, :, 0, 0]).astype(jnp.bfloat16)          # (C, C)
    h2_2d = h2.reshape(M, C)
    if "wd" in p:
        sd, bd = bn_affine(p["bnd_gamma"], p["bnd_beta"], p["bnd_mean"], p["bnd_var"])
        wd = (jnp.transpose(p["wd"][:, :, 0, 0]) * sd).astype(jnp.bfloat16)
        out2d = conv1x1_down_residual_relu(h2_2d, w3, xs2d_bf16, wd, bd, tile_m)
    else:
        out2d = conv1x1_identity_residual_relu(h2_2d, w3, xs2d_f32, tile_m)

    return out2d.reshape(N, Ho, Wo, C).transpose(0, 3, 1, 2)  # back to NCHW


# ----------------------------- pure-JAX reference ------------------------------

def grouped_residual_block_ref(x, p, stride, cardinality):
    dn = ("NCHW", "OIHW", "NCHW")

    def bn(z, g, b, m, v, eps=1e-5):
        s = g / jnp.sqrt(v + eps)
        return z * s[None, :, None, None] + (b - m * s)[None, :, None, None]

    out = lax.conv_general_dilated(x, p["w1"], (stride, stride), "VALID",
                                   dimension_numbers=dn)
    out = jax.nn.relu(bn(out, p["bn1_gamma"], p["bn1_beta"],
                         p["bn1_mean"], p["bn1_var"]))
    out = lax.conv_general_dilated(out, p["w2"], (1, 1), ((1, 1), (1, 1)),
                                   dimension_numbers=dn,
                                   feature_group_count=cardinality)
    out = jax.nn.relu(bn(out, p["bn2_gamma"], p["bn2_beta"],
                         p["bn2_mean"], p["bn2_var"]))
    out = lax.conv_general_dilated(out, p["w3"], (1, 1), "VALID",
                                   dimension_numbers=dn)
    if "wd" in p:
        res = lax.conv_general_dilated(x, p["wd"], (stride, stride), "VALID",
                                       dimension_numbers=dn)
        res = bn(res, p["bnd_gamma"], p["bnd_beta"], p["bnd_mean"], p["bnd_var"])
    else:
        res = x
    return jax.nn.relu(out + res)


# ----------------------------------- main --------------------------------------

if __name__ == "__main__":
    key = jax.random.PRNGKey(0)
    k1, k2, k3, k4 = jax.random.split(key, 4)

    # Case 1: downsample branch (stride=2, Cin != Cout).
    N, Cin, H, W = 2, 64, 16, 16
    Cout, stride, cardinality = 128, 2, 32
    x1 = jax.random.normal(k1, (N, Cin, H, W), jnp.float32)
    p1 = init_params(k2, Cin, Cout, stride, cardinality)
    out1 = jax.block_until_ready(grouped_residual_block_pallas(x1, p1, stride, cardinality))
    ref1 = grouped_residual_block_ref(x1, p1, stride, cardinality)
    np.testing.assert_allclose(np.asarray(out1), np.asarray(ref1),
                               rtol=3e-2, atol=3e-2)   # bf16 MXU operands

    # Case 2: identity-residual fast path (stride=1, Cin == Cout).
    N, Cin, H, W = 2, 128, 16, 16
    Cout, stride, cardinality = 128, 1, 32
    x2 = jax.random.normal(k3, (N, Cin, H, W), jnp.float32)
    p2 = init_params(k4, Cin, Cout, stride, cardinality)
    out2 = jax.block_until_ready(grouped_residual_block_pallas(x2, p2, stride, cardinality))
    ref2 = grouped_residual_block_ref(x2, p2, stride, cardinality)
    np.testing.assert_allclose(np.asarray(out2), np.asarray(ref2),
                               rtol=3e-2, atol=3e-2)

    print("KERNEL_OK")
</pallas_src>

<mosaic_0001>
module attributes {stable_mosaic.version = 11 : i64} {
  func.func @_matmul_shift_relu_kernel(%arg0: i32, %arg1: memref<128x64xbf16, #tpu.memory_space<vmem>>, %arg2: memref<64x128xbf16, #tpu.memory_space<vmem>>, %arg3: memref<1x128xf32, #tpu.memory_space<vmem>>, %arg4: memref<128x128xbf16, #tpu.memory_space<vmem>>) attributes {dimension_semantics = [#tpu.dimension_semantics<parallel>], iteration_bounds = array<i64: 1>, scalar_prefetch = 0 : i64, scratch_operands = 0 : i64, tpu.core_type = #tpu.core_type<tc>, window_params = [{transform_indices = @transform_0, window_bounds = array<i64: 128, 64>}, {pipeline_mode = #tpu.pipeline_mode<synchronous>, transform_indices = @transform_1, window_bounds = array<i64: 64, 128>}, {pipeline_mode = #tpu.pipeline_mode<synchronous>, transform_indices = @transform_2, window_bounds = array<i64: 1, 128>}, {transform_indices = @transform_3, window_bounds = array<i64: 128, 128>}]} {
    %c0 = arith.constant 0 : index
    %c0_0 = arith.constant 0 : index
    %0 = vector.load %arg1[%c0, %c0_0] : memref<128x64xbf16, #tpu.memory_space<vmem>>, vector<128x64xbf16>
    %c0_1 = arith.constant 0 : index
    %c0_2 = arith.constant 0 : index
    %1 = vector.load %arg2[%c0_1, %c0_2] : memref<64x128xbf16, #tpu.memory_space<vmem>>, vector<64x128xbf16>
    %cst = arith.constant dense<0.000000e+00> : vector<128x128xf32>
    %2 = tpu.matmul %0, %1, %cst {dimension_numbers = #tpu.dot_dimension_numbers<[1], [0], [0], [1], [0, 0, 1, 1], [], []>} : vector<128x64xbf16>, vector<64x128xbf16>, vector<128x128xf32> -> vector<128x128xf32>
    %c0_3 = arith.constant 0 : index
    %c0_4 = arith.constant 0 : index
    %3 = vector.load %arg3[%c0_3, %c0_4] : memref<1x128xf32, #tpu.memory_space<vmem>>, vector<1x128xf32>
    %4 = vector.broadcast %3 : vector<1x128xf32> to vector<128x128xf32>
    %5 = arith.addf %2, %4 : vector<128x128xf32>
    %cst_5 = arith.constant 0.000000e+00 : f32
    %6 = vector.broadcast %cst_5 : f32 to vector<128x128xf32>
    %7 = arith.maximumf %5, %6 : vector<128x128xf32>
    %8 = arith.truncf %7 : vector<128x128xf32> to vector<128x128xbf16>
    %c0_6 = arith.constant 0 : index
    %c0_7 = arith.constant 0 : index
    %9 = vector.load %arg4[%c0_6, %c0_7] : memref<128x128xbf16, #tpu.memory_space<vmem>>, vector<128x128xbf16>
    tpu.vector_store %arg4[%c0_6, %c0_7], %8 {strides = array<i32>} : memref<128x128xbf16, #tpu.memory_space<vmem>>, vector<128x128xbf16>,
    return
  }
  func.func @transform_0(%arg0: i32) -> (i32, i32) {
    %c0_i32 = arith.constant 0 : i32
    %c0_i32_0 = arith.constant 0 : i32
    return %arg0, %c0_i32 : i32, i32
  }
  func.func @transform_1(%arg0: i32) -> (i32, i32) {
    %c0_i32 = arith.constant 0 : i32
    %c0_i32_0 = arith.constant 0 : i32
    %c0_i32_1 = arith.constant 0 : i32
    return %c0_i32, %c0_i32_0 : i32, i32
  }
  func.func @transform_2(%arg0: i32) -> (i32, i32) {
    %c0_i32 = arith.constant 0 : i32
    %c0_i32_0 = arith.constant 0 : i32
    %c0_i32_1 = arith.constant 0 : i32
    return %c0_i32, %c0_i32_0 : i32, i32
  }
  func.func @transform_3(%arg0: i32) -> (i32, i32) {
    %c0_i32 = arith.constant 0 : i32
    %c0_i32_0 = arith.constant 0 : i32
    return %arg0, %c0_i32 : i32, i32
  }
}

</mosaic_0001>

<llo_original>
// kernel: tpu_custom_call.1
$region0: #{tpu_custom_call.1}
  #allocation0 [shape = 'u32[]', space=smem, size = 0x4, offset = 0x4, fixed_abs, tag = 'smem constant byte address 0x4 - core index']
  #allocation1 [shape = 'u32[72,128]{1,0:T(1,128)}', space=vmem, size = 0x9000, scoped, tag = 'internal scratch']
  %s0 = inlined_call_operand.vmem [shape: bf16[128,64], index: 0, kind: input, shape index: {}]
  %s1 = inlined_call_operand.vmem [shape: bf16[64,128], index: 1, kind: input, shape index: {}]
  %s2 = inlined_call_operand.vmem [shape: f32[1,128], index: 2, kind: input, shape index: {}]
  %s3 = inlined_call_operand.hbm [shape: bf16[128,128], index: 3, kind: output, shape index: {}]
  %s4 = sld [smem:[#allocation0]]
  $region22: #{tpu_custom_call.1} parent=0
    _
  %s6 = ssub.s32 1, %s4
  %s7 = scalar_select 0, %s6, %s4
  $region1: #{tpu_custom_call.1} parent=0
    #allocation2 [shape = 'u8[32768]{0}', space=vmem, size = 0x8000, scoped, tag = 'output window, operand 0, single buffered']
    #allocation3 [shape = 's32[1]{0}', space=sflag, size = 0x4, scoped, tag = 'scoped memory for tpu_custom_call.1']
    %8 = vsyncpa [#allocation3], 0
    // Predicated region
    $region2: #{tpu_custom_call.1} parent=1 // pred_check
      _
    $region3: #{tpu_custom_call.1} parent=1 // pred_check_branch
      %10 = sbr.rel (0) target = $region5
    $region4: #{tpu_custom_call.1} parent=1 // pred_region
      _
    $region5: #{tpu_custom_call.1} parent=1 // pred_fallthru
      _
    // Predicated region
    $region6: #{tpu_custom_call.1} parent=1 // pred_check
      _
    $region7: #{tpu_custom_call.1} parent=1 // pred_check_branch
      %12 = sbr.rel (0) target = $region9
    $region8: #{tpu_custom_call.1} parent=1 // pred_region
      _
    $region9: #{tpu_custom_call.1} parent=1 // pred_fallthru
      _
    // Predicated region
    $region10: #{tpu_custom_call.1} parent=1 // pred_check
      _
    $region11: #{tpu_custom_call.1} parent=1 // pred_check_branch
      %14 = sbr.rel (0) target = $region13
    $region12: #{tpu_custom_call.1} parent=1 // pred_region
      _
    $region13: #{tpu_custom_call.1} parent=1 // pred_fallthru
      _
    %v16 = vld [vmem:[%s0] sm:$0xf]
    %v17 = vld [vmem:[%s0 + $0x4] sm:$0xf]
    %v18 = vld [vmem:[%s0 + $0x8] sm:$0xf]
    %v19 = vld [vmem:[%s0 + $0xc] sm:$0xf]
    %v20 = vld [vmem:[%s0 + $0x10] sm:$0xf]
    %v21 = vld [vmem:[%s0 + $0x14] sm:$0xf]
    %v22 = vld [vmem:[%s0 + $0x18] sm:$0xf]
    %v23 = vld [vmem:[%s0 + $0x1c] sm:$0xf]
    %v24 = vld [vmem:[%s0 + $0x20] sm:$0xf]
    %v25 = vld [vmem:[%s0 + $0x24] sm:$0xf]
    %v26 = vld [vmem:[%s0 + $0x28] sm:$0xf]
    %v27 = vld [vmem:[%s0 + $0x2c] sm:$0xf]
    %v28 = vld [vmem:[%s0 + $0x30] sm:$0xf]
    %v29 = vld [vmem:[%s0 + $0x34] sm:$0xf]
    %v30 = vld [vmem:[%s0 + $0x38] sm:$0xf]
    %v31 = vld [vmem:[%s0 + $0x3c] sm:$0xf]
    %v32 = vld [vmem:[%s1] sm:$0xf]
    %v33 = vld [vmem:[%s1 + $0x4] sm:$0xf]
    %v34 = vld [vmem:[%s1 + $0x8] sm:$0xf]
    %v35 = vld [vmem:[%s1 + $0xc] sm:$0xf]
    %v36 = vld [vmem:[%s1 + $0x10] sm:$0xf]
    %v37 = vld [vmem:[%s1 + $0x14] sm:$0xf]
    %v38 = vld [vmem:[%s1 + $0x18] sm:$0xf]
    %v39 = vld [vmem:[%s1 + $0x1c] sm:$0xf]
    %v40 = vld [vmem:[%s2] sm:$0x1]
    %v42 = vperm.slane %v40, 0
    %v60 = vunpack.c.l.b16 %v16
    %v61 = vunpack.c.l.b16 %v17
    %v62 = vunpack.c.l.b16 %v18
    %v63 = vunpack.c.l.b16 %v19
    %v64 = vunpack.c.l.b16 %v20
    %v65 = vunpack.c.l.b16 %v21
    %v66 = vunpack.c.l.b16 %v22
    %v67 = vunpack.c.l.b16 %v23
    %v68 = vunpack.c.l.b16 %v24
    %v69 = vunpack.c.l.b16 %v25
    %v70 = vunpack.c.l.b16 %v26
    %v71 = vunpack.c.l.b16 %v27
    %v72 = vunpack.c.l.b16 %v28
    %v73 = vunpack.c.l.b16 %v29
    %v74 = vunpack.c.l.b16 %v30
    %v75 = vunpack.c.l.b16 %v31
    %v76 = vpack.c.b16 %v61, %v60
    %v77 = vpack.c.b16 %v63, %v62
    %v78 = vpack.c.b16 %v65, %v64
    %v79 = vpack.c.b16 %v67, %v66
    %v80 = vpack.c.b16 %v69, %v68
    %v81 = vpack.c.b16 %v71, %v70
    %v82 = vpack.c.b16 %v73, %v72
    %v83 = vpack.c.b16 %v75, %v74
    %v92 = vunpack.c.l.b16 %v32
    %v93 = vunpack.c.l.b16 %v33
    %v94 = vunpack.c.l.b16 %v34
    %v95 = vunpack.c.l.b16 %v35
    %v96 = vunpack.c.l.b16 %v36
    %v97 = vunpack.c.l.b16 %v37
    %v98 = vunpack.c.l.b16 %v38
    %v99 = vunpack.c.l.b16 %v39
    %v100 = vpack.c.b16 %v93, %v92
    %v101 = vpack.c.b16 %v95, %v94
    %v102 = vpack.c.b16 %v97, %v96
    %v103 = vpack.c.b16 %v99, %v98
    %vm108 = vcmask 523264
    %v110 = vsel %vm108, %v76, 0
    %v113 = vsel %vm108, %v77, 0
    %v116 = vsel %vm108, %v78, 0
    %v119 = vsel %vm108, %v79, 0
    %v122 = vsel %vm108, %v80, 0
    %v125 = vsel %vm108, %v81, 0
    %v128 = vsel %vm108, %v82, 0
    %v131 = vsel %vm108, %v83, 0
    %133 = vmatpush.bf16.msra.mxu0 0
    %134 = vmatpush.bf16.msra.mxu0 0
    %135 = vmatpush.bf16.msra.mxu0 0
    %136 = vmatpush.bf16.msra.mxu0 0
    %137 = vmatpush.bf16.msra.mxu0 %v103
    %138 = vmatpush.bf16.msra.mxu0 %v102
    %139 = vmatpush.bf16.msra.mxu0 %v101
    %140 = vmatpush.bf16.msra.mxu0 %v100
    %141 = vmatmul.bf16.gmra.mxu0 %v110
    %v142 = vpop.f32.mrf.mxu0
    %v143 = vadd.f32 %v42, %v142
    %v144 = vpop.f32.mrf.mxu0
    %v145 = vadd.f32 %v42, %v144
    %146 = vmatmul.bf16.gmra.mxu0 %v113
    %v147 = vpop.f32.mrf.mxu0
    %v148 = vadd.f32 %v42, %v147
    %v149 = vpop.f32.mrf.mxu0
    %v150 = vadd.f32 %v42, %v149
    %151 = vmatmul.bf16.gmra.mxu0 %v116
    %v152 = vpop.f32.mrf.mxu0
    %v153 = vadd.f32 %v42, %v152
    %v154 = vpop.f32.mrf.mxu0
    %v155 = vadd.f32 %v42, %v154
    %156 = vmatmul.bf16.gmra.mxu0 %v119
    %v157 = vpop.f32.mrf.mxu0
    %v158 = vadd.f32 %v42, %v157
    %v159 = vpop.f32.mrf.mxu0
    %v160 = vadd.f32 %v42, %v159
    %161 = vmatmul.bf16.gmra.mxu0 %v122
    %v162 = vpop.f32.mrf.mxu0
    %v163 = vadd.f32 %v42, %v162
    %v164 = vpop.f32.mrf.mxu0
    %v165 = vadd.f32 %v42, %v164
    %166 = vmatmul.bf16.gmra.mxu0 %v125
    %v167 = vpop.f32.mrf.mxu0
    %v168 = vadd.f32 %v42, %v167
    %v169 = vpop.f32.mrf.mxu0
    %v170 = vadd.f32 %v42, %v169
    %171 = vmatmul.bf16.gmra.mxu0 %v128
    %v172 = vpop.f32.mrf.mxu0
    %v173 = vadd.f32 %v42, %v172
    %v174 = vpop.f32.mrf.mxu0
    %v175 = vadd.f32 %v42, %v174
    %176 = vmatmul.bf16.gmra.mxu0 %v131
    %v177 = vpop.f32.mrf.mxu0
    %v178 = vadd.f32 %v42, %v177
    %v179 = vpop.f32.mrf.mxu0
    %v180 = vadd.f32 %v42, %v179
    %181 = vdwg.mxu0
    %v182 = vmax.f32 %v143, 0.0
    %v183 = vmax.f32 %v145, 0.0
    %v184 = vmax.f32 %v148, 0.0
    %v185 = vmax.f32 %v150, 0.0
    %v186 = vmax.f32 %v153, 0.0
    %v187 = vmax.f32 %v155, 0.0
    %v188 = vmax.f32 %v158, 0.0
    %v189 = vmax.f32 %v160, 0.0
    %v190 = vmax.f32 %v163, 0.0
    %v191 = vmax.f32 %v165, 0.0
    %v192 = vmax.f32 %v168, 0.0
    %v193 = vmax.f32 %v170, 0.0
    %v194 = vmax.f32 %v173, 0.0
    %v195 = vmax.f32 %v175, 0.0
    %v196 = vmax.f32 %v178, 0.0
    %v197 = vmax.f32 %v180, 0.0
    %v198 = vpack.c.bf16 %v182, %v182
    %v199 = vpack.c.bf16 %v183, %v183
    %v200 = vpack.c.bf16 %v184, %v184
    %v201 = vpack.c.bf16 %v185, %v185
    %v202 = vpack.c.bf16 %v186, %v186
    %v203 = vpack.c.bf16 %v187, %v187
    %v204 = vpack.c.bf16 %v188, %v188
    %v205 = vpack.c.bf16 %v189, %v189
    %v206 = vpack.c.bf16 %v190, %v190
    %v207 = vpack.c.bf16 %v191, %v191
    %v208 = vpack.c.bf16 %v192, %v192
    %v209 = vpack.c.bf16 %v193, %v193
    %v210 = vpack.c.bf16 %v194, %v194
    %v211 = vpack.c.bf16 %v195, %v195
    %v212 = vpack.c.bf16 %v196, %v196
    %v213 = vpack.c.bf16 %v197, %v197
    %214 = vst [vmem:[#allocation2] sm:$0xf] %v198
    %215 = vst [vmem:[#allocation2 + $0x4] sm:$0xf] %v199
    %216 = vst [vmem:[#allocation2 + $0x8] sm:$0xf] %v200
    %217 = vst [vmem:[#allocation2 + $0xc] sm:$0xf] %v201
    %218 = vst [vmem:[#allocation2 + $0x10] sm:$0xf] %v202
    %219 = vst [vmem:[#allocation2 + $0x14] sm:$0xf] %v203
    %220 = vst [vmem:[#allocation2 + $0x18] sm:$0xf] %v204
    %221 = vst [vmem:[#allocation2 + $0x1c] sm:$0xf] %v205
    %222 = vst [vmem:[#allocation2 + $0x20] sm:$0xf] %v206
    %223 = vst [vmem:[#allocation2 + $0x24] sm:$0xf] %v207
    %224 = vst [vmem:[#allocation2 + $0x28] sm:$0xf] %v208
    %225 = vst [vmem:[#allocation2 + $0x2c] sm:$0xf] %v209
    %226 = vst [vmem:[#allocation2 + $0x30] sm:$0xf] %v210
    %227 = vst [vmem:[#allocation2 + $0x34] sm:$0xf] %v211
    %228 = vst [vmem:[#allocation2 + $0x38] sm:$0xf] %v212
    %229 = vst [vmem:[#allocation2 + $0x3c] sm:$0xf] %v213
    // Predicated region
    $region14: #{tpu_custom_call.1} parent=1 // pred_check
      _
    $region15: #{tpu_custom_call.1} parent=1 // pred_check_branch
      %231 = sbr.rel (0) target = $region17
    $region16: #{tpu_custom_call.1} parent=1 // pred_region
      %233 = vsyncadd [#allocation3], 0
      %s234 = sshll.u32 [#allocation2], 4
      %s235 = int_to_ptr.vmem [resolvable:$true] %s234
      %s236 = sshll.u32 %s3, 4
      %s237 = int_to_ptr.hbm [resolvable:$true] %s236
      %242 = dma.vmem_to_hbm [thread:$0]  %s235, 1024, %s237, [#allocation3], 64, 64, 4
    $region17: #{tpu_custom_call.1} parent=1 // pred_fallthru
      _
    // Predicated region
    $region18: #{tpu_custom_call.1} parent=1 // pred_check
      _
    $region19: #{tpu_custom_call.1} parent=1 // pred_check_branch
      %244 = sbr.rel (0) target = $region21
    $region20: #{tpu_custom_call.1} parent=1 // pred_region
      %246 = dma.done [#allocation3], 1024
    $region21: #{tpu_custom_call.1} parent=1 // pred_fallthru
      _
    %247 = vsyncpa [#allocation3], 1

</llo_original>
